<compile_context>
chip_gen: v5e
topology: v5e:2x2
jax: 0.10.0
libtpu: 0.0.40
codegen_flags: <defaults>
</compile_context>

<pallas_src>
import jax
import jax.numpy as jnp
from jax import lax
from jax.experimental import pallas as pl
from jax.experimental.pallas import tpu as pltpu


def _disc_kernel(node_ref, v_ref, b_ref, out_ref):
    # score[0, n] = sum_i v[0, i] * node[n, i]
    # v @ node.T: RHS-transposed matmul (same MXU feed as flash-attn q.k^T) -> no
    # XLU transpose of the large (tm, n_in) node tile; lane-dense (1, tm) result.
    score = lax.dot_general(
        v_ref[...], node_ref[...],
        dimension_numbers=(((1,), (1,)), ((), ())),
        preferred_element_type=jnp.float32)               # (1, tm) f32
    out_ref[...] = jax.nn.sigmoid(score + b_ref[0])[None]  # (1, 1, tm)


def _disc_kernel_sbias(node_ref, v_ref, sb_ref, b_ref, out_ref):
    score = lax.dot_general(
        v_ref[...], node_ref[...],
        dimension_numbers=(((1,), (1,)), ((), ())),
        preferred_element_type=jnp.float32)               # (1, tm)
    out_ref[...] = jax.nn.sigmoid(score[None] + b_ref[0] + sb_ref[...])


def _vmem_capacity_bytes():
    try:
        return int(pltpu.get_tpu_info().vmem_capacity_bytes)
    except Exception:
        return 64 * 1024 * 1024   # conservative fallback: v7x per-TensorCore VMEM


def _pick_tiling(n_rows, n_in, itemsize, has_sbias):
    """Pick (row_tile, vmem_limit_bytes).

    Row tile is a multiple of 8 (of 128 when >= 128).  Node-tile footprint is
    lane-padding-aware (n_in rounded up to 128 lanes); total resident VMEM
    (2x node + 2x out (+ 2x s_bias)) is kept under ~half of physical VMEM
    (~28 MiB on v7x, ~48 MiB on v5e/v6e), with a 16 MiB per-node-buffer cap
    (HBM roofline saturates around 4-8 MiB tiles)."""
    lanes = ((max(1, n_in) + 127) // 128) * 128
    row_bytes = lanes * itemsize                         # lane-padded node row in VMEM
    cap = _vmem_capacity_bytes()
    resident_budget = min(cap // 2 - (4 << 20), 48 << 20)
    resident_budget = max(resident_budget, 8 << 20)
    # per-row resident cost: 2 node buffers + 2 out buffers ((1, tm) f32 is
    # sublane-padded to 8) + 2 s_bias buffers when present.
    per_row = 2 * row_bytes + (2 if has_sbias else 1) * 2 * 8 * 4
    tm = resident_budget // per_row
    tm = min(tm, (16 << 20) // row_bytes)                # <= 16 MiB per node buffer
    tm = min(tm, 1 << 15)
    rows8 = max(8, ((n_rows + 7) // 8) * 8)
    tm = min(tm, rows8)
    # Prefer >= 8 grid steps when tiles stay >= 1024 rows: lets the two v7x
    # TensorCores split the "parallel" axis and keeps the DMA pipeline busy.
    tm_for_8_steps = (rows8 // 8 // 128) * 128
    if tm_for_8_steps >= 1024:
        tm = min(tm, tm_for_8_steps)
    if tm >= 128:
        tm = (tm // 128) * 128
    else:
        tm = max(8, (tm // 8) * 8)
    vmem_limit = min(cap - (8 << 20), resident_budget + (16 << 20))
    vmem_limit = max(vmem_limit, 32 << 20)
    return int(tm), int(vmem_limit)


def discriminator_forward(S, node, W, bias, s_bias=None):
    """S: (n_out,) or (1, n_out); node: (N, n_in); W: (1, n_in, n_out); bias: (1,)."""
    N, n_in = node.shape
    n_out = W.shape[-1]
    dtype = node.dtype                                   # keep node's dtype (no upcast)

    # Collapse the bilinear once (tiny): v = W[0] @ S, shape (n_in,).
    # Note: casting v to node.dtype (e.g. bf16) quantizes W[0]@S slightly; f32 MXU
    # accumulation limits the deviation.
    S_vec = jnp.reshape(S, (n_out,)).astype(jnp.float32)
    v = jnp.dot(W[0].astype(jnp.float32), S_vec)         # (n_in,) f32
    v2d = jnp.reshape(v, (1, n_in)).astype(dtype)

    itemsize = jnp.dtype(dtype).itemsize
    tm, vmem_limit = _pick_tiling(N, n_in, itemsize, s_bias is not None)
    grid_n = pl.cdiv(N, tm)
    n_pad = grid_n * tm

    bias_sm = jnp.reshape(bias, (1,)).astype(jnp.float32)

    # node streamed unpadded; the ragged last block's OOB rows produce garbage
    # scores only in output positions that are sliced off by [:N].
    node_spec = pl.BlockSpec((tm, n_in), lambda i: (i, 0))
    v_spec = pl.BlockSpec((1, n_in), lambda i: (0, 0))              # grid-invariant
    bias_spec = pl.BlockSpec(memory_space=pltpu.MemorySpace.SMEM)   # scalar bias
    out_spec = pl.BlockSpec((1, 1, tm), lambda i: (i, 0, 0))
    out_shape = jax.ShapeDtypeStruct((grid_n, 1, tm), jnp.float32)
    cparams = pltpu.CompilerParams(
        dimension_semantics=("parallel",),
        vmem_limit_bytes=vmem_limit)

    if s_bias is None:
        out = pl.pallas_call(
            _disc_kernel,
            grid=(grid_n,),
            out_shape=out_shape,
            in_specs=[node_spec, v_spec, bias_spec],
            out_specs=out_spec,
            compiler_params=cparams,
        )(node, v2d, bias_sm)
    else:
        # Padding s_bias costs ~N*4 bytes, negligible vs streaming node once.
        sb = jnp.reshape(s_bias, (N,)).astype(jnp.float32)
        if n_pad != N:
            sb = jnp.pad(sb, (0, n_pad - N))
        sb = jnp.reshape(sb, (grid_n, 1, tm))
        sb_spec = pl.BlockSpec((1, 1, tm), lambda i: (i, 0, 0))
        out = pl.pallas_call(
            _disc_kernel_sbias,
            grid=(grid_n,),
            out_shape=out_shape,
            in_specs=[node_spec, v_spec, sb_spec, bias_spec],
            out_specs=out_spec,
            compiler_params=cparams,
        )(node, v2d, sb, bias_sm)

    return jnp.reshape(out, (n_pad,))[:N]                # (N,)


def _xavier_uniform(key, shape):
    # PyTorch fan calc for (1, n_in, n_out): fan_in = n_in*n_out, fan_out = 1*n_out
    fan_in = shape[1] * shape[2]
    fan_out = shape[0] * shape[2]
    bound = (6.0 / (fan_in + fan_out)) ** 0.5
    return jax.random.uniform(key, shape, jnp.float32, -bound, bound)


def _ref_forward(S, node, W, bias, s_bias=None):
    N = node.shape[0]
    S_exp = jnp.broadcast_to(jnp.reshape(S, (1, -1)), (N, S.size))
    score = jnp.einsum("ni,ij,nj->n", node, W[0], S_exp) + bias[0]
    if s_bias is not None:
        score = score + s_bias
    return jax.nn.sigmoid(score)


if __name__ == "__main__":
    key = jax.random.PRNGKey(0)
    ok = True
    # (N, H, use_s_bias): toy shapes from the module, plus a multi-tile case that
    # exercises the ragged (unpadded) last node block and the s_bias path.
    for (N, H, use_sb) in [(8, 32, False), (8, 32, True), (4100, 64, True)]:
        k1, k2, k3, k4, key = jax.random.split(key, 5)
        node = jax.random.normal(k1, (N, H), jnp.float32)       # per-node embeddings
        S = jax.random.normal(k2, (1, H), jnp.float32)          # graph summary vector
        W = _xavier_uniform(k3, (1, H, H))                      # nn.Bilinear weight
        bias = jnp.zeros((1,), jnp.float32)                     # bias.fill_(0.0)
        s_bias = jax.random.normal(k4, (N,), jnp.float32) if use_sb else None

        out = discriminator_forward(S, node, W, bias, s_bias=s_bias)
        out = jax.block_until_ready(out)

        ref = _ref_forward(S, node, W, bias, s_bias)
        assert out.shape == (N,)
        if not jnp.allclose(out, ref, atol=2e-5, rtol=2e-5):
            ok = False
            print("MISMATCH", N, H, use_sb,
                  float(jnp.max(jnp.abs(out - ref))))

    if ok:
        print("KERNEL_OK")
</pallas_src>

<mosaic_0001>
module attributes {stable_mosaic.version = 11 : i64} {
  func.func @_disc_kernel(%arg0: i32, %arg1: memref<8x32xf32, #tpu.memory_space<vmem>>, %arg2: memref<1x32xf32, #tpu.memory_space<vmem>>, %arg3: memref<1xf32, #tpu.memory_space<smem>>, %arg4: memref<1x1x8xf32, #tpu.memory_space<vmem>>) attributes {dimension_semantics = [#tpu.dimension_semantics<parallel>], iteration_bounds = array<i64: 1>, scalar_prefetch = 0 : i64, scratch_operands = 0 : i64, tpu.core_type = #tpu.core_type<tc>, window_params = [{transform_indices = @transform_0, window_bounds = array<i64: 8, 32>}, {pipeline_mode = #tpu.pipeline_mode<synchronous>, transform_indices = @transform_1, window_bounds = array<i64: 1, 32>}, {transform_indices = @transform_2, window_bounds = array<i64: 1>}, {transform_indices = @transform_3, window_bounds = array<i64: 1, 1, 8>}]} {
    %c0 = arith.constant 0 : index
    %c0_0 = arith.constant 0 : index
    %0 = vector.load %arg2[%c0, %c0_0] : memref<1x32xf32, #tpu.memory_space<vmem>>, vector<1x32xf32>
    %c0_1 = arith.constant 0 : index
    %c0_2 = arith.constant 0 : index
    %1 = vector.load %arg1[%c0_1, %c0_2] : memref<8x32xf32, #tpu.memory_space<vmem>>, vector<8x32xf32>
    %cst = arith.constant dense<0.000000e+00> : vector<1x8xf32>
    %2 = tpu.matmul %0, %1, %cst {dimension_numbers = #tpu.dot_dimension_numbers<[1], [1], [0], [0], [0, 0, 1, 0], [], []>} : vector<1x32xf32>, vector<8x32xf32>, vector<1x8xf32> -> vector<1x8xf32>
    %c0_3 = arith.constant 0 : index
    %3 = memref.load %arg3[%c0_3] : memref<1xf32, #tpu.memory_space<smem>>
    %4 = vector.broadcast %3 : f32 to vector<1x8xf32>
    %5 = arith.addf %2, %4 : vector<1x8xf32>
    %6 = arith.negf %5 : vector<1x8xf32>
    %7 = math.exp %6 : vector<1x8xf32>
    %cst_4 = arith.constant 1.000000e+00 : f32
    %8 = vector.broadcast %cst_4 : f32 to vector<1x8xf32>
    %9 = arith.addf %8, %7 : vector<1x8xf32>
    %10 = arith.divf %8, %9 : vector<1x8xf32>
    %11 = vector.shape_cast %10 : vector<1x8xf32> to vector<1x1x8xf32>
    %c0_5 = arith.constant 0 : index
    %c0_6 = arith.constant 0 : index
    %c0_7 = arith.constant 0 : index
    %12 = vector.load %arg4[%c0_5, %c0_6, %c0_7] : memref<1x1x8xf32, #tpu.memory_space<vmem>>, vector<1x1x8xf32>
    tpu.vector_store %arg4[%c0_5, %c0_6, %c0_7], %11 {strides = array<i32>} : memref<1x1x8xf32, #tpu.memory_space<vmem>>, vector<1x1x8xf32>,
    return
  }
  func.func @transform_0(%arg0: i32) -> (i32, i32) {
    %c0_i32 = arith.constant 0 : i32
    %c0_i32_0 = arith.constant 0 : i32
    return %arg0, %c0_i32 : i32, i32
  }
  func.func @transform_1(%arg0: i32) -> (i32, i32) {
    %c0_i32 = arith.constant 0 : i32
    %c0_i32_0 = arith.constant 0 : i32
    %c0_i32_1 = arith.constant 0 : i32
    return %c0_i32, %c0_i32_0 : i32, i32
  }
  func.func @transform_2(%arg0: i32) -> i32 {
    %c0_i32 = arith.constant 0 : i32
    %c0_i32_0 = arith.constant 0 : i32
    return %c0_i32 : i32
  }
  func.func @transform_3(%arg0: i32) -> (i32, i32, i32) {
    %c0_i32 = arith.constant 0 : i32
    %c0_i32_0 = arith.constant 0 : i32
    %c0_i32_1 = arith.constant 0 : i32
    return %arg0, %c0_i32, %c0_i32_0 : i32, i32, i32
  }
}

</mosaic_0001>

<llo_original>
// kernel: tpu_custom_call.1
$region0: #{tpu_custom_call.1}
  #allocation0 [shape = 'u32[]', space=smem, size = 0x4, offset = 0x4, fixed_abs, tag = 'smem constant byte address 0x4 - core index']
  #allocation1 [shape = 'u32[72,128]{1,0:T(1,128)}', space=vmem, size = 0x9000, scoped, tag = 'internal scratch']
  #allocation2 [shape = 'f32[1]{0:T(128)S(6)}', space=smem, size = 0x200, scoped, tag = 'scoped memory for tpu_custom_call.1']
  %s0 = inlined_call_operand.hbm [shape: f32[8,32], index: 0, kind: input, shape index: {}]
  %s1 = inlined_call_operand.vmem [shape: f32[1,32], index: 1, kind: input, shape index: {}]
  %s2 = inlined_call_operand.<no memory space> [shape: f32[1], index: 2, kind: input, shape index: {}]
  %s3 = inlined_call_operand.hbm [shape: f32[1,1,8], index: 3, kind: output, shape index: {}]
  %s4 = sld [smem:[#allocation0]]
  $region26: #{tpu_custom_call.1} parent=0
    _
  %s6 = ssub.s32 1, %s4
  %s7 = scalar_select 0, %s6, %s4
  %8 = sst [smem:[#allocation2]] %s2
  $region1: #{tpu_custom_call.1} parent=0
    #allocation3 [shape = 'u8[4096]{0}', space=vmem, size = 0x1000, scoped, tag = 'input window, operand 0, single buffered']
    #allocation4 [shape = 's32[1]{0}', space=sflag, size = 0x4, scoped, tag = 'scoped memory for tpu_custom_call.1']
    #allocation5 [shape = 's32[1]{0}', space=sflag, size = 0x4, scoped, tag = 'scoped memory for tpu_custom_call.1']
    #allocation6 [shape = 'u8[512]{0}', space=vmem, size = 0x400, scoped, tag = 'output window, operand 0, single buffered']
    %9 = vsyncpa [#allocation4], 0
    %10 = vsyncpa [#allocation5], 0
    // Predicated region
    $region2: #{tpu_custom_call.1} parent=1 // pred_check
      _
    $region3: #{tpu_custom_call.1} parent=1 // pred_check_branch
      %12 = sbr.rel (0) target = $region5
    $region4: #{tpu_custom_call.1} parent=1 // pred_region
      %14 = vsyncadd [#allocation4], 0
      %s16 = sshll.u32 %s0, 4
      %s17 = int_to_ptr.hbm [resolvable:$true] %s16
      %s18 = sshll.u32 [#allocation3], 4
      %s19 = int_to_ptr.vmem [resolvable:$true] %s18
      %21 = dma.hbm_to_vmem [thread:$0]  %s17, 128, %s19, [#allocation4]
    $region5: #{tpu_custom_call.1} parent=1 // pred_fallthru
      _
    // Predicated region
    $region6: #{tpu_custom_call.1} parent=1 // pred_check
      _
    $region7: #{tpu_custom_call.1} parent=1 // pred_check_branch
      %23 = sbr.rel (0) target = $region9
    $region8: #{tpu_custom_call.1} parent=1 // pred_region
      _
    $region9: #{tpu_custom_call.1} parent=1 // pred_fallthru
      _
    // Predicated region
    $region10: #{tpu_custom_call.1} parent=1 // pred_check
      _
    $region11: #{tpu_custom_call.1} parent=1 // pred_check_branch
      %25 = sbr.rel (0) target = $region13
    $region12: #{tpu_custom_call.1} parent=1 // pred_region
      _
    $region13: #{tpu_custom_call.1} parent=1 // pred_fallthru
      _
    // Predicated region
    $region14: #{tpu_custom_call.1} parent=1 // pred_check
      _
    $region15: #{tpu_custom_call.1} parent=1 // pred_check_branch
      %27 = sbr.rel (0) target = $region17
    $region16: #{tpu_custom_call.1} parent=1 // pred_region
      %29 = dma.done [#allocation4], 128
    $region17: #{tpu_custom_call.1} parent=1 // pred_fallthru
      _
    %v30 = vld [vmem:[%s1] sm:$0x1]
    %v31 = vld [vmem:[#allocation3] sm:$0xff]
    %s32 = sld [smem:[#allocation2]]
    %v33 = vstv %s32
    %vm34 = vcmask 261120
    %v36 = vsel %vm34, %v30, 0
    %v39 = vsel %vm34, %v31, 0
    %41 = vmatpush.xpose.msra.mxu0 0.0
    %42 = vmatpush.xpose.msra.mxu0 0.0
    %43 = vmatpush.xpose.msra.mxu0 0.0
    %44 = vmatpush.xpose.msra.mxu0 0.0
    %45 = vmatpush.xpose.msra.mxu0 0.0
    %46 = vmatpush.xpose.msra.mxu0 0.0
    %47 = vmatpush.xpose.msra.mxu0 0.0
    %48 = vmatpush.xpose.msra.mxu0 0.0
    %49 = vmatpush.xpose.msra.mxu0 0.0
    %50 = vmatpush.xpose.msra.mxu0 0.0
    %51 = vmatpush.xpose.msra.mxu0 0.0
    %52 = vmatpush.xpose.msra.mxu0 0.0
    %53 = vmatpush.xpose.msra.mxu0 0.0
    %54 = vmatpush.xpose.msra.mxu0 0.0
    %55 = vmatpush.xpose.msra.mxu0 0.0
    %56 = vmatpush.xpose.msra.mxu0 %v39
    %57 = vmatmul.f32.gmra.mxu0 %v36
    %v58 = vpop.f32.mrf.mxu0
    %v59 = vadd.f32 %v33, %v58
    %60 = vdwg.mxu0
    %v61 = vxor.u32 %v59, 2147483648
    %v62 = vmul.f32 %v61, 1.442695
    %v63 = vpow.pop %v62
    %v64 = vadd.f32 %v63, 1.0
    %v65 = vrcp.pop %v64
    %v66 = vmul.f32 %v64, %v65
    %v67 = vsub.f32 1.0, %v66
    %v68 = vmul.f32 %v65, %v67
    %v69 = vadd.f32 %v65, %v68
    %vm70 = vweird.f32 %v64
    %vm71 = vweird.f32 %v65
    %vm72 = vmor %vm70, %vm71
    %v73 = vsel %vm72, %v65, %v69
    %v74 = vand.u32 2147483647, %v64
    %vm75 = vcmp.eq.f32.partialorder %v74, 8.507059e+37
    %v76 = vand.u32 %v64, 2147483648
    %v77 = vor.u32 1.1754944e-38, %v76
    %v78 = vsel %vm75, %v77, %v73
    %v79 = vmul.f32 1.0, %v78
    %vm80 = vcmask 57344
    %81 = vst.msk [vmem:[#allocation6] sm:$0x1] %vm80, %v79
    // Predicated region
    $region18: #{tpu_custom_call.1} parent=1 // pred_check
      _
    $region19: #{tpu_custom_call.1} parent=1 // pred_check_branch
      %83 = sbr.rel (0) target = $region21
    $region20: #{tpu_custom_call.1} parent=1 // pred_region
      %85 = vsyncadd [#allocation5], 0
      %s87 = sshll.u32 [#allocation6], 4
      %s88 = int_to_ptr.vmem [resolvable:$true] %s87
      %s89 = sshll.u32 %s3, 4
      %s90 = int_to_ptr.hbm [resolvable:$true] %s89
      %92 = dma.vmem_to_hbm [thread:$0]  %s88, 16, %s90, [#allocation5]
    $region21: #{tpu_custom_call.1} parent=1 // pred_fallthru
      _
    // Predicated region
    $region22: #{tpu_custom_call.1} parent=1 // pred_check
      _
    $region23: #{tpu_custom_call.1} parent=1 // pred_check_branch
      %94 = sbr.rel (0) target = $region25
    $region24: #{tpu_custom_call.1} parent=1 // pred_region
      %96 = dma.done [#allocation5], 16
    $region25: #{tpu_custom_call.1} parent=1 // pred_fallthru
      _
    %97 = vsyncpa [#allocation4], 1
    %98 = vsyncpa [#allocation5], 1

</llo_original>
